<compile_context>
chip_gen: v5e
topology: v5e:2x2
jax: 0.10.0
libtpu: 0.0.40
codegen_flags: <defaults>
</compile_context>

<pallas_src>
import jax
import jax.numpy as jnp
from jax.experimental import pallas as pl
from jax.experimental.pallas import tpu as pltpu

HIDDEN = 128
LANE = 128
BF16_SUBLANE = 16  # bf16 packs 2 rows per sublane


def _round_up(x, m):
    return (x + m - 1) // m * m


def _cdiv(a, b):
    return -(-a // b)


def _choose_tile(batch, block_b):
    """16-aligned batch tile giving an even number of grid steps (v7x balance)
    while amortizing the ~0.35 us per-grid-step overhead."""
    block_b = max(BF16_SUBLANE, _round_up(block_b, BF16_SUBLANE))
    n_pairs = max(1, _cdiv(batch, 2 * block_b))
    n_tiles = 2 * n_pairs
    tb = _round_up(_cdiv(batch, n_tiles), BF16_SUBLANE)
    return min(tb, _round_up(batch, BF16_SUBLANE))


# ------------------------------- kernel ------------------------------------

def trpo_forward_kernel(x_ref, w1_ref, b1_ref, w2_ref, b2_ref, out_ref):
    # Pack f32 activations to bf16 on the VPU (hidden under DMA/MXU);
    # accumulation and the softmax epilogue stay f32 (v5e has no bf16 VPU/EUP).
    x = x_ref[...].astype(jnp.bfloat16)
    h = jnp.dot(x, w1_ref[...], preferred_element_type=jnp.float32)        # [TB, 128]
    h = jnp.maximum(h + b1_ref[...], 0.0)                                  # relu(fc_1)
    logits = jnp.dot(h.astype(jnp.bfloat16), w2_ref[...],
                     preferred_element_type=jnp.float32) + b2_ref[...]     # [TB, N_pad]
    # Numerically stable softmax; padded action lanes carry -1e30 bias -> ~0.
    m = jnp.max(logits, axis=-1, keepdims=True)
    e = jnp.exp(logits - m)
    denom = jnp.sum(e, axis=-1, keepdims=True)
    # Exact division (kernel is not EUP-bound); only loss is the bf16 store.
    out_ref[...] = (e / denom).astype(out_ref.dtype)


# ------------------------------ wrappers ------------------------------------

def prepare_trpo_params(w1, b1, w2, b2):
    """One-time weight prep (hoisted out of the per-rollout forward):
    pad + cast to bf16 MXU operands; biases stay f32 (padded logits -> -1e30)."""
    K, H = w1.shape
    N = w2.shape[1]
    assert H == HIDDEN and w2.shape[0] == HIDDEN

    K_pad = _round_up(K, BF16_SUBLANE)   # bf16 sublane packing
    N_pad = _round_up(N, LANE)           # lane-dense output (unmasked vst)

    w1f = w1.astype(jnp.float32)
    w2f = w2.astype(jnp.float32)
    b1f = b1.astype(jnp.float32).reshape(1, HIDDEN)
    b2f = b2.astype(jnp.float32).reshape(1, N)

    if K_pad != K:
        w1f = jnp.pad(w1f, ((0, K_pad - K), (0, 0)))
    if N_pad != N:
        w2f = jnp.pad(w2f, ((0, 0), (0, N_pad - N)))
        # Huge negative f32 bias on padded action lanes -> exp underflows to 0.
        b2f = jnp.pad(b2f, ((0, 0), (0, N_pad - N)), constant_values=-1e30)

    return {
        "w1": w1f.astype(jnp.bfloat16),
        "b1": b1f,
        "w2": w2f.astype(jnp.bfloat16),
        "b2": b2f,
        "num_inputs": K,
        "num_outputs": N,
        "k_pad": K_pad,
        "n_pad": N_pad,
    }


def trpo_forward(x, params, *, block_b=1024, out_dtype=jnp.float32):
    """Batched TRPO policy forward. x: [B, num_inputs] -> policy [B, num_outputs]."""
    B, K = x.shape
    assert K == params["num_inputs"]
    K_pad, N_pad, N = params["k_pad"], params["n_pad"], params["num_outputs"]

    xf = x.astype(jnp.float32)
    if K_pad != K:
        xf = jnp.pad(xf, ((0, 0), (0, K_pad - K)))   # zero cols: matmul no-op

    TB = _choose_tile(B, block_b)
    grid = (_cdiv(B, TB),)                           # last block may be ragged

    flops = 2 * B * (K_pad * HIDDEN + HIDDEN * N_pad)
    bytes_accessed = (B * K_pad * 4            # x (f32 in)
                      + B * N_pad * 2          # policy (bf16 out)
                      + K_pad * HIDDEN * 2     # w1 (bf16)
                      + HIDDEN * N_pad * 2     # w2 (bf16)
                      + (HIDDEN + N_pad) * 4)  # biases (f32)

    out = pl.pallas_call(
        trpo_forward_kernel,
        out_shape=jax.ShapeDtypeStruct((B, N_pad), jnp.bfloat16),
        grid=grid,
        in_specs=[
            pl.BlockSpec((TB, K_pad), lambda i: (i, 0)),       # x: batch-tiled
            pl.BlockSpec((K_pad, HIDDEN), lambda i: (0, 0)),   # w1: resident
            pl.BlockSpec((1, HIDDEN), lambda i: (0, 0)),       # b1: resident
            pl.BlockSpec((HIDDEN, N_pad), lambda i: (0, 0)),   # w2: resident
            pl.BlockSpec((1, N_pad), lambda i: (0, 0)),        # b2: resident
        ],
        out_specs=pl.BlockSpec((TB, N_pad), lambda i: (i, 0)),
        compiler_params=pltpu.CompilerParams(
            dimension_semantics=("parallel",),     # megacore-shard the batch axis
            vmem_limit_bytes=32 * 1024 * 1024,
        ),
        cost_estimate=pl.CostEstimate(
            flops=flops,
            transcendentals=B * N_pad,
            bytes_accessed=bytes_accessed,
        ),
    )(xf, params["w1"], params["b1"], params["w2"], params["b2"])
    return out[:, :N].astype(out_dtype)


# ---------------------------- init & references ----------------------------

def xavier_uniform(key, fan_in, fan_out, dtype=jnp.float32):
    # nn.init.xavier_uniform_ (gain=1): U(-a, a), a = sqrt(6/(fan_in+fan_out)).
    a = (6.0 / (fan_in + fan_out)) ** 0.5
    return jax.random.uniform(key, (fan_in, fan_out), dtype=dtype, minval=-a, maxval=a)


def init_trpo_params(key, num_inputs, num_outputs):
    k1, k2, k3, k4 = jax.random.split(key, 4)
    w1 = xavier_uniform(k1, num_inputs, HIDDEN)          # fc_1.weight^T
    w2 = xavier_uniform(k2, HIDDEN, num_outputs)         # fc_2.weight^T
    # PyTorch Linear default bias init: U(-1/sqrt(fan_in), 1/sqrt(fan_in)).
    b1 = jax.random.uniform(k3, (1, HIDDEN), minval=-1.0 / num_inputs ** 0.5,
                            maxval=1.0 / num_inputs ** 0.5).astype(jnp.float32)
    b2 = jax.random.uniform(k4, (1, num_outputs), minval=-1.0 / HIDDEN ** 0.5,
                            maxval=1.0 / HIDDEN ** 0.5).astype(jnp.float32)
    return w1, b1, w2, b2


def reference_forward_f32(x, w1, b1, w2, b2):
    h = jnp.maximum(x @ w1 + b1, 0.0)
    return jax.nn.softmax(h @ w2 + b2, axis=-1)


def reference_forward_bf16(x, w1, b1, w2, b2):
    # Mirrors the kernel's bf16-operand / f32-accumulation matmul path.
    h = jnp.dot(x.astype(jnp.bfloat16), w1.astype(jnp.bfloat16),
                preferred_element_type=jnp.float32)
    h = jnp.maximum(h + b1, 0.0)
    logits = jnp.dot(h.astype(jnp.bfloat16), w2.astype(jnp.bfloat16),
                     preferred_element_type=jnp.float32) + b2
    return jax.nn.softmax(logits, axis=-1)


if __name__ == "__main__":
    key = jax.random.PRNGKey(0)
    num_inputs, num_outputs = 35, 4   # non-multiple-of-16 K exercises the pad path
    batch = 300                       # many states per pallas_call (rollout batch)

    kx, kp = jax.random.split(key)
    x = jax.random.normal(kx, (batch, num_inputs), dtype=jnp.float32)
    w1, b1, w2, b2 = init_trpo_params(kp, num_inputs, num_outputs)

    # Weight prep happens once, not per forward call.
    params = prepare_trpo_params(w1, b1, w2, b2)

    # block_b=128 -> TB=80, grid=(4,): exercises tiling + a ragged last block.
    policy = trpo_forward(x, params, block_b=128)
    jax.block_until_ready(policy)

    assert policy.shape == (batch, num_outputs)
    assert policy.dtype == jnp.float32

    # Loose check vs. pure-f32 reference (bf16 matmul operands + bf16 store).
    ref32 = reference_forward_f32(x, w1, b1, w2, b2)
    assert jnp.allclose(policy, ref32, atol=5e-2, rtol=5e-2)

    # Tighter check vs. a reference using the same bf16 matmul path
    # (remaining delta is only the final bf16 output rounding, <= ~2^-9 rel).
    refbf = reference_forward_bf16(x, w1, b1, w2, b2)
    assert jnp.allclose(policy, refbf, atol=1e-2, rtol=1e-2)

    # Rows are probability distributions (exact division; only bf16 output
    # rounding perturbs the sums, ~2e-3 worst case for 4 actions).
    assert jnp.allclose(jnp.sum(policy, axis=-1), 1.0, atol=1e-2)
    assert bool(jnp.all(policy >= 0.0))

    print("KERNEL_OK")
</pallas_src>

<mosaic_0001>
module attributes {stable_mosaic.version = 11 : i64} {
  func.func @trpo_forward_kernel(%arg0: i32, %arg1: memref<80x48xf32, #tpu.memory_space<vmem>>, %arg2: memref<48x128xbf16, #tpu.memory_space<vmem>>, %arg3: memref<1x128xf32, #tpu.memory_space<vmem>>, %arg4: memref<128x128xbf16, #tpu.memory_space<vmem>>, %arg5: memref<1x128xf32, #tpu.memory_space<vmem>>, %arg6: memref<80x128xbf16, #tpu.memory_space<vmem>>) attributes {dimension_semantics = [#tpu.dimension_semantics<parallel>], iteration_bounds = array<i64: 4>, scalar_prefetch = 0 : i64, scratch_operands = 0 : i64, tpu.core_type = #tpu.core_type<tc>, window_params = [{transform_indices = @transform_0, window_bounds = array<i64: 80, 48>}, {pipeline_mode = #tpu.pipeline_mode<synchronous>, transform_indices = @transform_1, window_bounds = array<i64: 48, 128>}, {pipeline_mode = #tpu.pipeline_mode<synchronous>, transform_indices = @transform_2, window_bounds = array<i64: 1, 128>}, {pipeline_mode = #tpu.pipeline_mode<synchronous>, transform_indices = @transform_3, window_bounds = array<i64: 128, 128>}, {pipeline_mode = #tpu.pipeline_mode<synchronous>, transform_indices = @transform_4, window_bounds = array<i64: 1, 128>}, {transform_indices = @transform_5, window_bounds = array<i64: 80, 128>}]} {
    %c0 = arith.constant 0 : index
    %c0_0 = arith.constant 0 : index
    %0 = vector.load %arg1[%c0, %c0_0] : memref<80x48xf32, #tpu.memory_space<vmem>>, vector<80x48xf32>
    %1 = arith.truncf %0 : vector<80x48xf32> to vector<80x48xbf16>
    %c0_1 = arith.constant 0 : index
    %c0_2 = arith.constant 0 : index
    %2 = vector.load %arg2[%c0_1, %c0_2] : memref<48x128xbf16, #tpu.memory_space<vmem>>, vector<48x128xbf16>
    %cst = arith.constant dense<0.000000e+00> : vector<80x128xf32>
    %3 = tpu.matmul %1, %2, %cst {dimension_numbers = #tpu.dot_dimension_numbers<[1], [0], [0], [1], [0, 0, 1, 1], [], []>} : vector<80x48xbf16>, vector<48x128xbf16>, vector<80x128xf32> -> vector<80x128xf32>
    %c0_3 = arith.constant 0 : index
    %c0_4 = arith.constant 0 : index
    %4 = vector.load %arg3[%c0_3, %c0_4] : memref<1x128xf32, #tpu.memory_space<vmem>>, vector<1x128xf32>
    %5 = vector.broadcast %4 : vector<1x128xf32> to vector<80x128xf32>
    %6 = arith.addf %3, %5 : vector<80x128xf32>
    %cst_5 = arith.constant 0.000000e+00 : f32
    %7 = vector.broadcast %cst_5 : f32 to vector<80x128xf32>
    %8 = arith.maximumf %6, %7 : vector<80x128xf32>
    %9 = arith.truncf %8 : vector<80x128xf32> to vector<80x128xbf16>
    %c0_6 = arith.constant 0 : index
    %c0_7 = arith.constant 0 : index
    %10 = vector.load %arg4[%c0_6, %c0_7] : memref<128x128xbf16, #tpu.memory_space<vmem>>, vector<128x128xbf16>
    %cst_8 = arith.constant dense<0.000000e+00> : vector<80x128xf32>
    %11 = tpu.matmul %9, %10, %cst_8 {dimension_numbers = #tpu.dot_dimension_numbers<[1], [0], [0], [1], [0, 0, 1, 1], [], []>} : vector<80x128xbf16>, vector<128x128xbf16>, vector<80x128xf32> -> vector<80x128xf32>
    %c0_9 = arith.constant 0 : index
    %c0_10 = arith.constant 0 : index
    %12 = vector.load %arg5[%c0_9, %c0_10] : memref<1x128xf32, #tpu.memory_space<vmem>>, vector<1x128xf32>
    %13 = vector.broadcast %12 : vector<1x128xf32> to vector<80x128xf32>
    %14 = arith.addf %11, %13 : vector<80x128xf32>
    %cst_11 = arith.constant dense<0xFF800000> : vector<80xf32>
    %15 = vector.multi_reduction <maximumf>, %14, %cst_11 [1] : vector<80x128xf32> to vector<80xf32>
    %16 = vector.shape_cast %15 : vector<80xf32> to vector<80x1xf32>
    %17 = vector.broadcast %16 : vector<80x1xf32> to vector<80x128xf32>
    %18 = arith.subf %14, %17 : vector<80x128xf32>
    %19 = math.exp %18 : vector<80x128xf32>
    %cst_12 = arith.constant dense<0.000000e+00> : vector<80xf32>
    %20 = vector.multi_reduction <add>, %19, %cst_12 [1] : vector<80x128xf32> to vector<80xf32>
    %21 = vector.shape_cast %20 : vector<80xf32> to vector<80x1xf32>
    %22 = vector.broadcast %21 : vector<80x1xf32> to vector<80x128xf32>
    %23 = arith.divf %19, %22 : vector<80x128xf32>
    %24 = arith.truncf %23 : vector<80x128xf32> to vector<80x128xbf16>
    %c0_13 = arith.constant 0 : index
    %c0_14 = arith.constant 0 : index
    %25 = vector.load %arg6[%c0_13, %c0_14] : memref<80x128xbf16, #tpu.memory_space<vmem>>, vector<80x128xbf16>
    tpu.vector_store %arg6[%c0_13, %c0_14], %24 {strides = array<i32>} : memref<80x128xbf16, #tpu.memory_space<vmem>>, vector<80x128xbf16>,
    return
  }
  func.func @transform_0(%arg0: i32) -> (i32, i32) {
    %c0_i32 = arith.constant 0 : i32
    %c0_i32_0 = arith.constant 0 : i32
    return %arg0, %c0_i32 : i32, i32
  }
  func.func @transform_1(%arg0: i32) -> (i32, i32) {
    %c0_i32 = arith.constant 0 : i32
    %c0_i32_0 = arith.constant 0 : i32
    %c0_i32_1 = arith.constant 0 : i32
    return %c0_i32, %c0_i32_0 : i32, i32
  }
  func.func @transform_2(%arg0: i32) -> (i32, i32) {
    %c0_i32 = arith.constant 0 : i32
    %c0_i32_0 = arith.constant 0 : i32
    %c0_i32_1 = arith.constant 0 : i32
    return %c0_i32, %c0_i32_0 : i32, i32
  }
  func.func @transform_3(%arg0: i32) -> (i32, i32) {
    %c0_i32 = arith.constant 0 : i32
    %c0_i32_0 = arith.constant 0 : i32
    %c0_i32_1 = arith.constant 0 : i32
    return %c0_i32, %c0_i32_0 : i32, i32
  }
  func.func @transform_4(%arg0: i32) -> (i32, i32) {
    %c0_i32 = arith.constant 0 : i32
    %c0_i32_0 = arith.constant 0 : i32
    %c0_i32_1 = arith.constant 0 : i32
    return %c0_i32, %c0_i32_0 : i32, i32
  }
  func.func @transform_5(%arg0: i32) -> (i32, i32) {
    %c0_i32 = arith.constant 0 : i32
    %c0_i32_0 = arith.constant 0 : i32
    return %arg0, %c0_i32 : i32, i32
  }
}

</mosaic_0001>

<llo_original>
// kernel: tpu_custom_call.1
$region0: #{tpu_custom_call.1}
  #allocation0 [shape = 'u32[]', space=smem, size = 0x4, offset = 0x4, fixed_abs, tag = 'smem constant byte address 0x4 - core index']
  #allocation1 [shape = 'u32[72,128]{1,0:T(1,128)}', space=vmem, size = 0x9000, scoped, tag = 'internal scratch']
  %s0 = inlined_call_operand.vmem [shape: f32[300,48], index: 0, kind: input, shape index: {}]
  %s1 = inlined_call_operand.vmem [shape: bf16[48,128], index: 1, kind: input, shape index: {}]
  %s2 = inlined_call_operand.vmem [shape: f32[1,128], index: 2, kind: input, shape index: {}]
  %s3 = inlined_call_operand.vmem [shape: bf16[128,128], index: 3, kind: input, shape index: {}]
  %s4 = inlined_call_operand.vmem [shape: f32[1,128], index: 4, kind: input, shape index: {}]
  %s5 = inlined_call_operand.hbm [shape: bf16[300,128], index: 5, kind: output, shape index: {}]
  %s6 = sld [smem:[#allocation0]]
  $region53: #{tpu_custom_call.1} parent=0
    _
  %s8 = ssub.s32 1, %s6
  %s9 = scalar_select 0, %s8, %s6
  $region1: #{tpu_custom_call.1} parent=0
    #allocation2 [shape = 'u8[40960]{0}', space=vmem, size = 0xa000, scoped, tag = 'output window, operand 0']
    #allocation3 [shape = 's32[2]{0}', space=sflag, size = 0x8, scoped, tag = 'scoped memory for tpu_custom_call.1']
    %10 = vsyncpa [#allocation3], 0
    %s11 = scalar_lea.sflag [#allocation3], 1
    %12 = vsyncpa %s11, 0
    loop: start=0, step=1, limit=6
    $region2: #{tpu_custom_call.1} parent=1 // loop_pre_header
      _
    $region3: #{tpu_custom_call.1} parent=1 // loop_header
      %s14 = sphi 0, %s18
      %p15 = scmp.ge.s32.totalorder %s14, 6
      %s24 = sphi 0, %s26
      %s27 = sphi 0, %s24
      %s28 = sphi 0, %s27
      %s44 = sphi 0, %s28
      %s48 = sphi 0, %s48
      %s50 = sphi 0, %s48
      %s51 = sphi 0, %s50
      %s65 = sphi 0, %s51
      %s69 = sphi 0, %s69
      %s71 = sphi 0, %s69
      %s72 = sphi 0, %s71
      %s86 = sphi 0, %s72
      %s90 = sphi 0, %s90
      %s92 = sphi 0, %s90
      %s93 = sphi 0, %s92
      %s107 = sphi 0, %s93
      %s111 = sphi 0, %s111
      %s113 = sphi 0, %s111
      %s114 = sphi 0, %s113
      %s128 = sphi 0, %s114
      %s134 = sphi 0, %s136
      %s137 = sphi 0, %s134
      %s138 = sphi 0, %s137
      %s154 = sphi 0, %s138
    $region4: #{tpu_custom_call.1} parent=1 // loop_header_branch
      %17 = sbr.rel (%p15) target = $region8
    $region5: #{tpu_custom_call.1} parent=1 // loop_body
      %s19 = ssub.s32 %s14, 1
      %s20 = ssub.s32 %s14, 2
      %s21 = sadd.s32 %s14, 1
      %s22 = ssub.s32 %s14, %s21
      %p23 = scmp.eq.s32.totalorder %s22, 0
      %s25 = sadd.s32 %s24, 1
      %s26 = scalar_select %p23, %s24, %s25
      %p29 = pneg %p23
      %p30 = scmp.eq.s32.totalorder %s14, 3
      %p31 = por %p29, %p30
      %p32 = scmp.ne.s32.totalorder %s24, %s27
      %p33 = scmp.eq.s32.totalorder %s14, 0
      %p34 = por %p32, %p33
      %p35 = scmp.ne.s32.totalorder %s24, %s27
      %p36 = scmp.eq.s32.totalorder %s19, 3
      %p37 = por %p35, %p36
      %p38 = scmp.ne.s32.totalorder %s27, %s28
      %p39 = scmp.eq.s32.totalorder %s19, 0
      %p40 = por %p38, %p39
      %p41 = scmp.ne.s32.totalorder %s27, %s28
      %p42 = scmp.eq.s32.totalorder %s20, 3
      %p43 = por %p41, %p42
      %p45 = scmp.ne.s32.totalorder %s28, %s44
      %p46 = scmp.eq.s32.totalorder %s20, 0
      %p47 = por %p45, %p46
      %s49 = sadd.s32 %s48, 1
      %p52 = scmp.eq.s32.totalorder %s14, 3
      %p53 = scmp.ne.s32.totalorder %s48, %s50
      %p54 = scmp.eq.s32.totalorder %s14, 0
      %p55 = por %p53, %p54
      %p56 = scmp.ne.s32.totalorder %s48, %s50
      %p57 = scmp.eq.s32.totalorder %s19, 3
      %p58 = por %p56, %p57
      %p59 = scmp.ne.s32.totalorder %s50, %s51
      %p60 = scmp.eq.s32.totalorder %s19, 0
      %p61 = por %p59, %p60
      %p62 = scmp.ne.s32.totalorder %s50, %s51
      %p63 = scmp.eq.s32.totalorder %s20, 3
      %p64 = por %p62, %p63
      %p66 = scmp.ne.s32.totalorder %s51, %s65
      %p67 = scmp.eq.s32.totalorder %s20, 0
      %p68 = por %p66, %p67
      %s70 = sadd.s32 %s69, 1
      %p73 = scmp.eq.s32.totalorder %s14, 3
      %p74 = scmp.ne.s32.totalorder %s69, %s71
      %p75 = scmp.eq.s32.totalorder %s14, 0
      %p76 = por %p74, %p75
      %p77 = scmp.ne.s32.totalorder %s69, %s71
      %p78 = scmp.eq.s32.totalorder %s19, 3
      %p79 = por %p77, %p78
      %p80 = scmp.ne.s32.totalorder %s71, %s72
      %p81 = scmp.eq.s32.totalorder %s19, 0
      %p82 = por %p80, %p81
      %p83 = scmp.ne.s32.totalorder %s71, %s72
      %p84 = scmp.eq.s32.totalorder %s20, 3
      %p85 = por %p83, %p84
      %p87 = scmp.ne.s32.totalorder %s72, %s86
      %p88 = scmp.eq.s32.totalorder %s20, 0
      %p89 = por %p87, %p88
      %s91 = sadd.s32 %s90, 1
      %p94 = scmp.eq.s32.totalorder %s14, 3
      %p95 = scmp.ne.s32.totalorder %s90, %s92
      %p96 = scmp.eq.s32.totalorder %s14, 0
      %p97 = por %p95, %p96
      %p98 = scmp.ne.s32.totalorder %s90, %s92
      %p99 = scmp.eq.s32.totalorder %s19, 3
      %p100 = por %p98, %p99
      %p101 = scmp.ne.s32.totalorder %s92, %s93
      %p102 = scmp.eq.s32.totalorder %s19, 0
      %p103 = por %p101, %p102
      %p104 = scmp.ne.s32.totalorder %s92, %s93
      %p105 = scmp.eq.s32.totalorder %s20, 3
      %p106 = por %p104, %p105
      %p108 = scmp.ne.s32.totalorder %s93, %s107
      %p109 = scmp.eq.s32.totalorder %s20, 0
      %p110 = por %p108, %p109
      %s112 = sadd.s32 %s111, 1
      %p115 = scmp.eq.s32.totalorder %s14, 3
      %p116 = scmp.ne.s32.totalorder %s111, %s113
      %p117 = scmp.eq.s32.totalorder %s14, 0
      %p118 = por %p116, %p117
      %p119 = scmp.ne.s32.totalorder %s111, %s113
      %p120 = scmp.eq.s32.totalorder %s19, 3
      %p121 = por %p119, %p120
      %p122 = scmp.ne.s32.totalorder %s113, %s114
      %p123 = scmp.eq.s32.totalorder %s19, 0
      %p124 = por %p122, %p123
      %p125 = scmp.ne.s32.totalorder %s113, %s114
      %p126 = scmp.eq.s32.totalorder %s20, 3
      %p127 = por %p125, %p126
      %p129 = scmp.ne.s32.totalorder %s114, %s128
      %p130 = scmp.eq.s32.totalorder %s20, 0
      %p131 = por %p129, %p130
      %s132 = ssub.s32 %s14, %s21
      %p133 = scmp.eq.s32.totalorder %s132, 0
      %s135 = sadd.s32 %s134, 1
      %s136 = scalar_select %p133, %s134, %s135
      %p139 = pneg %p133
      %p140 = scmp.eq.s32.totalorder %s14, 3
      %p141 = por %p139, %p140
      %p142 = scmp.ne.s32.totalorder %s134, %s137
      %p143 = scmp.eq.s32.totalorder %s14, 0
      %p144 = por %p142, %p143
      %p145 = scmp.ne.s32.totalorder %s134, %s137
      %p146 = scmp.eq.s32.totalorder %s19, 3
      %p147 = por %p145, %p146
      %p148 = scmp.ne.s32.totalorder %s137, %s138
      %p149 = scmp.eq.s32.totalorder %s19, 0
      %p150 = por %p148, %p149
      %p151 = scmp.ne.s32.totalorder %s137, %s138
      %p152 = scmp.eq.s32.totalorder %s20, 3
      %p153 = por %p151, %p152
      %p155 = scmp.ne.s32.totalorder %s138, %s154
      %p156 = scmp.eq.s32.totalorder %s20, 0
      %p157 = por %p155, %p156
      %p158 = scmp.le.s32.totalorder 1, %s14
      %p159 = scmp.lt.s32.totalorder %s14, 5
      %p160 = pnand %p158, %p159
      %p161 = pneg %p160
      // Predicated region
      $region9: #{tpu_custom_call.1} parent=5 // pred_check
        _
      $region10: #{tpu_custom_call.1} parent=5 // pred_check_branch
        %163 = sbr.rel (%p160) target = $region12
      $region11: #{tpu_custom_call.1} parent=5 // pred_region
        %s164 = ssub.s32 %s14, 1
        // Predicated region
        $region13: #{tpu_custom_call.1} parent=11 // pred_check
          %p165 = pneg %p61
        $region14: #{tpu_custom_call.1} parent=11 // pred_check_branch
          %167 = sbr.rel (%p165) target = $region16
        $region15: #{tpu_custom_call.1} parent=11 // pred_region
          _
        $region16: #{tpu_custom_call.1} parent=11 // pred_fallthru
          _
        // Predicated region
        $region17: #{tpu_custom_call.1} parent=11 // pred_check
          %p168 = pneg %p82
        $region18: #{tpu_custom_call.1} parent=11 // pred_check_branch
          %170 = sbr.rel (%p168) target = $region20
        $region19: #{tpu_custom_call.1} parent=11 // pred_region
          _
        $region20: #{tpu_custom_call.1} parent=11 // pred_fallthru
          _
        // Predicated region
        $region21: #{tpu_custom_call.1} parent=11 // pred_check
          %p171 = pneg %p103
        $region22: #{tpu_custom_call.1} parent=11 // pred_check_branch
          %173 = sbr.rel (%p171) target = $region24
        $region23: #{tpu_custom_call.1} parent=11 // pred_region
          _
        $region24: #{tpu_custom_call.1} parent=11 // pred_fallthru
          _
        // Predicated region
        $region25: #{tpu_custom_call.1} parent=11 // pred_check
          %p174 = pneg %p124
        $region26: #{tpu_custom_call.1} parent=11 // pred_check_branch
          %176 = sbr.rel (%p174) target = $region28
        $region27: #{tpu_custom_call.1} parent=11 // pred_region
          _
        $region28: #{tpu_custom_call.1} parent=11 // pred_fallthru
          _
      $region12: #{tpu_custom_call.1} parent=5 // pred_fallthru
        _
      %p177 = scmp.lt.s32.totalorder %s14, 4
      // Predicated region
      $region29: #{tpu_custom_call.1} parent=5 // pred_check
        %p178 = pneg %p177
      $region30: #{tpu_custom_call.1} parent=5 // pred_check_branch
        %180 = sbr.rel (%p178) target = $region32
      $region31: #{tpu_custom_call.1} parent=5 // pred_region
        // Predicated region
        $region33: #{tpu_custom_call.1} parent=31 // pred_check
          %p181 = pneg %p34
        $region34: #{tpu_custom_call.1} parent=31 // pred_check_branch
          %183 = sbr.rel (%p181) target = $region36
        $region35: #{tpu_custom_call.1} parent=31 // pred_region
          %s184 = smul.u32 10, %s14
          %s185 = ssub.s32 38, %s184
          %p186 = scmp.lt.s32.totalorder %s185, 10
          %s187 = scalar_select %p186, %s185, 10
          %s188 = smul.u32 8, %s187
          %p189 = scmp.lt.s32.totalorder %s184, 37
          %s190 = scalar_select %p189, %s184, 37
          %s191 = smul.addr %s190, 8
          %s192 = scalar_lea.vmem %s0, %s191
          %s193 = smul.u32 10, %s14
          %s194 = ssub.s32 38, %s193
          %p195 = scmp.lt.s32.totalorder %s194, 10
          %s196 = scalar_select %p195, %s194, 10
          %s197 = smul.u32 8, %s196
        $region36: #{tpu_custom_call.1} parent=31 // pred_fallthru
          _
      $region32: #{tpu_custom_call.1} parent=5 // pred_fallthru
        _
      %p198 = scmp.le.s32.totalorder 1, %s14
      %p199 = scmp.lt.s32.totalorder %s14, 5
      %p200 = pnand %p198, %p199
      %p201 = pneg %p200
      // Predicated region
      $region37: #{tpu_custom_call.1} parent=5 // pred_check
        _
      $region38: #{tpu_custom_call.1} parent=5 // pred_check_branch
        %203 = sbr.rel (%p200) target = $region40
      $region39: #{tpu_custom_call.1} parent=5 // pred_region
        %s204 = ssub.s32 %s14, 1
        %s205 = smul.u32 10, %s19
        %s206 = ssub.s32 38, %s205
        %p207 = scmp.lt.s32.totalorder %s206, 10
        %s208 = scalar_select %p207, %s206, 10
        %s209 = smul.u32 8, %s208
        %p210 = scmp.lt.s32.totalorder %s205, 37
        %s211 = scalar_select %p210, %s205, 37
        %s212 = smul.addr %s211, 8
        %s213 = scalar_lea.vmem %s0, %s212
        %p214 = pneg %p40
        %p215 = pneg %p37
        %p216 = pneg %p61
        %p217 = pneg %p58
        %p218 = pneg %p82
        %p219 = pneg %p79
        %p220 = pneg %p103
        %p221 = pneg %p100
        %p222 = pneg %p124
        %p223 = pneg %p121
        %p224 = pneg %p150
        %p225 = pneg %p147
        %s226 = sand.u32 %s137, 1
        %s227 = scalar_lea.sflag [#allocation3], %s226
        %s228 = sand.u32 %s137, 1
        %s229 = smul.addr %s228, 40
        %s230 = scalar_lea.vmem [#allocation2], %s229
        %s231 = smul.u32 10, %s19
        %s232 = ssub.s32 38, %s231
        %p233 = scmp.lt.s32.totalorder %s232, 10
        %s234 = scalar_select %p233, %s232, 10
        %s235 = smul.u32 8, %s234
        %p236 = scmp.lt.s32.totalorder %s231, 37
        %s237 = scalar_select %p236, %s231, 37
        %s238 = smul.addr %s237, 8
        %s239 = scalar_lea.vmem %s0, %s238
        %s240 = smul.u32 10, %s19
        %s241 = ssub.s32 38, %s240
        %p242 = scmp.lt.s32.totalorder %s241, 10
        %s243 = scalar_select %p242, %s241, 10
        %s244 = smul.u32 8, %s243
        %s245 = smul.u32 10, %s19
        %s246 = ssub.s32 38, %s245
        %p247 = scmp.lt.s32.totalorder %s246, 10
        %s248 = scalar_select %p247, %s246, 10
        %s249 = smul.u32 4, %s248
        %v251 = vld [vmem:[%s239] sm:$0xff]
        %v252 = vld [vmem:[%s239 + $0x8] sm:$0xff]
        %v253 = vld [vmem:[%s239 + $0x10] sm:$0xff]
        %v254 = vld [vmem:[%s239 + $0x18] sm:$0xff]
        %v255 = vld [vmem:[%s239 + $0x20] sm:$0xff]
        %v256 = vld [vmem:[%s239 + $0x28] sm:$0xff]
        %v257 = vld [vmem:[%s239 + $0x30] sm:$0xff]
        %v258 = vld [vmem:[%s239 + $0x38] sm:$0xff]
        %v259 = vld [vmem:[%s239 + $0x40] sm:$0xff]
        %v260 = vld [vmem:[%s239 + $0x48] sm:$0xff]
        %v261 = vpack.c.bf16 %v252, %v251
        %v262 = vpack.c.bf16 %v254, %v253
        %v263 = vpack.c.bf16 %v256, %v255
        %v264 = vpack.c.bf16 %v258, %v257
        %v265 = vpack.c.bf16 %v260, %v259
        %v266 = vld [vmem:[%s1] sm:$0xf]
        %v267 = vld [vmem:[%s1 + $0x4] sm:$0xf]
        %v268 = vld [vmem:[%s1 + $0x8] sm:$0xf]
        %v269 = vld [vmem:[%s1 + $0xc] sm:$0xf]
        %v270 = vld [vmem:[%s1 + $0x10] sm:$0xf]
        %v271 = vld [vmem:[%s1 + $0x14] sm:$0xf]
        %v272 = vld [vmem:[%s2] sm:$0x1]
        %v274 = vperm.slane %v272, 0
        %v282 = vunpack.c.l.b16 %v266
        %v283 = vunpack.c.l.b16 %v267
        %v284 = vunpack.c.l.b16 %v268
        %v285 = vunpack.c.l.b16 %v269
        %v286 = vunpack.c.l.b16 %v270
        %v287 = vunpack.c.l.b16 %v271
        %v288 = vpack.c.b16 %v283, %v282
        %v289 = vpack.c.b16 %v285, %v284
        %v290 = vpack.c.b16 %v287, %v286
        %vm294 = vcmask 392192
        %v296 = vsel %vm294, %v261, 0
        %v299 = vsel %vm294, %v262, 0
        %v302 = vsel %vm294, %v263, 0
        %v305 = vsel %vm294, %v264, 0
        %v308 = vsel %vm294, %v265, 0
        %310 = vmatpush.bf16.msra.mxu0 0
        %311 = vmatpush.bf16.msra.mxu0 0
        %312 = vmatpush.bf16.msra.mxu0 0
        %313 = vmatpush.bf16.msra.mxu0 0
        %314 = vmatpush.bf16.msra.mxu0 0
        %315 = vmatpush.bf16.msra.mxu0 %v290
        %316 = vmatpush.bf16.msra.mxu0 %v289
        %317 = vmatpush.bf16.msra.mxu0 %v288
        %318 = vmatmul.bf16.gmra.mxu0 %v296
        %v319 = vpop.f32.mrf.mxu0
        %v320 = vadd.f32 %v274, %v319
        %v321 = vpop.f32.mrf.mxu0
        %v322 = vadd.f32 %v274, %v321
        %323 = vmatmul.bf16.gmra.mxu0 %v299
        %v324 = vpop.f32.mrf.mxu0
        %v325 = vadd.f32 %v274, %v324
        %v326 = vpop.f32.mrf.mxu0
        %v327 = vadd.f32 %v274, %v326
        %328 = vmatmul.bf16.gmra.mxu0 %v302
        %v329 = vpop.f32.mrf.mxu0
        %v330 = vadd.f32 %v274, %v329
        %v331 = vpop.f32.mrf.mxu0
        %v332 = vadd.f32 %v274, %v331
        %333 = vmatmul.bf16.gmra.mxu0 %v305
        %v334 = vpop.f32.mrf.mxu0
        %v335 = vadd.f32 %v274, %v334
        %v336 = vpop.f32.mrf.mxu0
        %v337 = vadd.f32 %v274, %v336
        %338 = vmatmul.bf16.gmra.mxu0 %v308
        %v339 = vpop.f32.mrf.mxu0
        %v340 = vadd.f32 %v274, %v339
        %v341 = vpop.f32.mrf.mxu0
        %v342 = vadd.f32 %v274, %v341
        %343 = vdwg.mxu0
        %v344 = vmax.f32 %v320, 0.0
        %v345 = vmax.f32 %v322, 0.0
        %v346 = vmax.f32 %v325, 0.0
        %v347 = vmax.f32 %v327, 0.0
        %v348 = vmax.f32 %v330, 0.0
        %v349 = vmax.f32 %v332, 0.0
        %v350 = vmax.f32 %v335, 0.0
        %v351 = vmax.f32 %v337, 0.0
        %v352 = vmax.f32 %v340, 0.0
        %v353 = vmax.f32 %v342, 0.0
        %v354 = vpack.c.bf16 %v345, %v344
        %v355 = vpack.c.bf16 %v347, %v346
        %v356 = vpack.c.bf16 %v349, %v348
        %v357 = vpack.c.bf16 %v351, %v350
        %v358 = vpack.c.bf16 %v353, %v352
        %v359 = vld [vmem:[%s3] sm:$0xf]
        %v360 = vld [vmem:[%s3 + $0x4] sm:$0xf]
        %v361 = vld [vmem:[%s3 + $0x8] sm:$0xf]
        %v362 = vld [vmem:[%s3 + $0xc] sm:$0xf]
        %v363 = vld [vmem:[%s3 + $0x10] sm:$0xf]
        %v364 = vld [vmem:[%s3 + $0x14] sm:$0xf]
        %v365 = vld [vmem:[%s3 + $0x18] sm:$0xf]
        %v366 = vld [vmem:[%s3 + $0x1c] sm:$0xf]
        %v367 = vld [vmem:[%s3 + $0x20] sm:$0xf]
        %v368 = vld [vmem:[%s3 + $0x24] sm:$0xf]
        %v369 = vld [vmem:[%s3 + $0x28] sm:$0xf]
        %v370 = vld [vmem:[%s3 + $0x2c] sm:$0xf]
        %v371 = vld [vmem:[%s3 + $0x30] sm:$0xf]
        %v372 = vld [vmem:[%s3 + $0x34] sm:$0xf]
        %v373 = vld [vmem:[%s3 + $0x38] sm:$0xf]
        %v374 = vld [vmem:[%s3 + $0x3c] sm:$0xf]
        %v375 = vld [vmem:[%s4] sm:$0x1]
        %v377 = vperm.slane %v375, 0
        %v395 = vunpack.c.l.b16 %v359
        %v396 = vunpack.c.l.b16 %v360
        %v397 = vunpack.c.l.b16 %v361
        %v398 = vunpack.c.l.b16 %v362
        %v399 = vunpack.c.l.b16 %v363
        %v400 = vunpack.c.l.b16 %v364
        %v401 = vunpack.c.l.b16 %v365
        %v402 = vunpack.c.l.b16 %v366
        %v403 = vunpack.c.l.b16 %v367
        %v404 = vunpack.c.l.b16 %v368
        %v405 = vunpack.c.l.b16 %v369
        %v406 = vunpack.c.l.b16 %v370
        %v407 = vunpack.c.l.b16 %v371
        %v408 = vunpack.c.l.b16 %v372
        %v409 = vunpack.c.l.b16 %v373
        %v410 = vunpack.c.l.b16 %v374
        %v411 = vpack.c.b16 %v396, %v395
        %v412 = vpack.c.b16 %v398, %v397
        %v413 = vpack.c.b16 %v400, %v399
        %v414 = vpack.c.b16 %v402, %v401
        %v415 = vpack.c.b16 %v404, %v403
        %v416 = vpack.c.b16 %v406, %v405
        %v417 = vpack.c.b16 %v408, %v407
        %v418 = vpack.c.b16 %v410, %v409
        %427 = vmatpush.bf16.msra.mxu0 %v418
        %428 = vmatpush.bf16.msra.mxu0 %v417
        %429 = vmatpush.bf16.msra.mxu0 %v416
        %430 = vmatpush.bf16.msra.mxu0 %v415
        %431 = vmatpush.bf16.msra.mxu0 %v414
        %432 = vmatpush.bf16.msra.mxu0 %v413
        %433 = vmatpush.bf16.msra.mxu0 %v412
        %434 = vmatpush.bf16.msra.mxu0 %v411
        %435 = vmatmul.bf16.gmra.mxu0 %v354
        %v436 = vpop.f32.mrf.mxu0
        %v437 = vadd.f32 %v377, %v436
        %v438 = vpop.f32.mrf.mxu0
        %v439 = vadd.f32 %v377, %v438
        %440 = vmatmul.bf16.gmra.mxu0 %v355
        %v441 = vpop.f32.mrf.mxu0
        %v442 = vadd.f32 %v377, %v441
        %v443 = vpop.f32.mrf.mxu0
        %v444 = vadd.f32 %v377, %v443
        %445 = vmatmul.bf16.gmra.mxu0 %v356
        %v446 = vpop.f32.mrf.mxu0
        %v447 = vadd.f32 %v377, %v446
        %v448 = vpop.f32.mrf.mxu0
        %v449 = vadd.f32 %v377, %v448
        %450 = vmatmul.bf16.gmra.mxu0 %v357
        %v451 = vpop.f32.mrf.mxu0
        %v452 = vadd.f32 %v377, %v451
        %v453 = vpop.f32.mrf.mxu0
        %v454 = vadd.f32 %v377, %v453
        %455 = vmatmul.bf16.gmra.mxu0 %v358
        %v456 = vpop.f32.mrf.mxu0
        %v457 = vadd.f32 %v377, %v456
        %v458 = vpop.f32.mrf.mxu0
        %v459 = vadd.f32 %v377, %v458
        %460 = vdwg.mxu0
        %461 = vmax.xlane.f32.xlu0 %v437
        %v462 = vpop.xlane.xlu0 %461
        %463 = vmax.xlane.f32.xlu0 %v439
        %v464 = vpop.xlane.xlu0 %463
        %465 = vmax.xlane.f32.xlu0 %v442
        %v466 = vpop.xlane.xlu0 %465
        %467 = vmax.xlane.f32.xlu0 %v444
        %v468 = vpop.xlane.xlu0 %467
        %469 = vmax.xlane.f32.xlu0 %v447
        %v470 = vpop.xlane.xlu0 %469
        %471 = vmax.xlane.f32.xlu0 %v449
        %v472 = vpop.xlane.xlu0 %471
        %473 = vmax.xlane.f32.xlu0 %v452
        %v474 = vpop.xlane.xlu0 %473
        %475 = vmax.xlane.f32.xlu0 %v454
        %v476 = vpop.xlane.xlu0 %475
        %477 = vmax.xlane.f32.xlu0 %v457
        %v478 = vpop.xlane.xlu0 %477
        %479 = vmax.xlane.f32.xlu0 %v459
        %v480 = vpop.xlane.xlu0 %479
        %v481 = vsub.f32 %v437, %v462
        %v482 = vsub.f32 %v439, %v464
        %v483 = vsub.f32 %v442, %v466
        %v484 = vsub.f32 %v444, %v468
        %v485 = vsub.f32 %v447, %v470
        %v486 = vsub.f32 %v449, %v472
        %v487 = vsub.f32 %v452, %v474
        %v488 = vsub.f32 %v454, %v476
        %v489 = vsub.f32 %v457, %v478
        %v490 = vsub.f32 %v459, %v480
        %v491 = vmul.f32 %v481, 1.442695
        %v492 = vpow.pop %v491
        %v493 = vmul.f32 %v482, 1.442695
        %v494 = vpow.pop %v493
        %v495 = vmul.f32 %v483, 1.442695
        %v496 = vpow.pop %v495
        %v497 = vmul.f32 %v484, 1.442695
        %v498 = vpow.pop %v497
        %v499 = vmul.f32 %v485, 1.442695
        %v500 = vpow.pop %v499
        %v501 = vmul.f32 %v486, 1.442695
        %v502 = vpow.pop %v501
        %v503 = vmul.f32 %v487, 1.442695
        %v504 = vpow.pop %v503
        %v505 = vmul.f32 %v488, 1.442695
        %v506 = vpow.pop %v505
        %v507 = vmul.f32 %v489, 1.442695
        %v508 = vpow.pop %v507
        %v509 = vmul.f32 %v490, 1.442695
        %v510 = vpow.pop %v509
        %511 = vadd.xlane.f32.xlu0 %v492
        %v512 = vpop.xlane.xlu0 %511
        %513 = vadd.xlane.f32.xlu0 %v494
        %v514 = vpop.xlane.xlu0 %513
        %515 = vadd.xlane.f32.xlu0 %v496
        %v516 = vpop.xlane.xlu0 %515
        %517 = vadd.xlane.f32.xlu0 %v498
        %v518 = vpop.xlane.xlu0 %517
        %519 = vadd.xlane.f32.xlu0 %v500
        %v520 = vpop.xlane.xlu0 %519
        %521 = vadd.xlane.f32.xlu0 %v502
        %v522 = vpop.xlane.xlu0 %521
        %523 = vadd.xlane.f32.xlu0 %v504
        %v524 = vpop.xlane.xlu0 %523
        %525 = vadd.xlane.f32.xlu0 %v506
        %v526 = vpop.xlane.xlu0 %525
        %527 = vadd.xlane.f32.xlu0 %v508
        %v528 = vpop.xlane.xlu0 %527
        %529 = vadd.xlane.f32.xlu0 %v510
        %v530 = vpop.xlane.xlu0 %529
        %v531 = vrcp.pop %v512
        %v532 = vmul.f32 %v512, %v531
        %v533 = vsub.f32 1.0, %v532
        %v534 = vmul.f32 %v531, %v533
        %v535 = vadd.f32 %v531, %v534
        %vm536 = vweird.f32 %v512
        %vm537 = vweird.f32 %v531
        %vm538 = vmor %vm536, %vm537
        %v539 = vsel %vm538, %v531, %v535
        %v540 = vand.u32 2147483647, %v512
        %vm541 = vcmp.eq.f32.partialorder %v540, 8.507059e+37
        %v542 = vand.u32 %v512, 2147483648
        %v543 = vor.u32 1.1754944e-38, %v542
        %v544 = vsel %vm541, %v543, %v539
        %v545 = vmul.f32 %v492, %v544
        %v546 = vrcp.pop %v514
        %v547 = vmul.f32 %v514, %v546
        %v548 = vsub.f32 1.0, %v547
        %v549 = vmul.f32 %v546, %v548
        %v550 = vadd.f32 %v546, %v549
        %vm551 = vweird.f32 %v514
        %vm552 = vweird.f32 %v546
        %vm553 = vmor %vm551, %vm552
        %v554 = vsel %vm553, %v546, %v550
        %v555 = vand.u32 2147483647, %v514
        %vm556 = vcmp.eq.f32.partialorder %v555, 8.507059e+37
        %v557 = vand.u32 %v514, 2147483648
        %v558 = vor.u32 1.1754944e-38, %v557
        %v559 = vsel %vm556, %v558, %v554
        %v560 = vmul.f32 %v494, %v559
        %v561 = vrcp.pop %v516
        %v562 = vmul.f32 %v516, %v561
        %v563 = vsub.f32 1.0, %v562
        %v564 = vmul.f32 %v561, %v563
        %v565 = vadd.f32 %v561, %v564
        %vm566 = vweird.f32 %v516
        %vm567 = vweird.f32 %v561
        %vm568 = vmor %vm566, %vm567
        %v569 = vsel %vm568, %v561, %v565
        %v570 = vand.u32 2147483647, %v516
        %vm571 = vcmp.eq.f32.partialorder %v570, 8.507059e+37
        %v572 = vand.u32 %v516, 2147483648
        %v573 = vor.u32 1.1754944e-38, %v572
        %v574 = vsel %vm571, %v573, %v569
        %v575 = vmul.f32 %v496, %v574
        %v576 = vrcp.pop %v518
        %v577 = vmul.f32 %v518, %v576
        %v578 = vsub.f32 1.0, %v577
        %v579 = vmul.f32 %v576, %v578
        %v580 = vadd.f32 %v576, %v579
        %vm581 = vweird.f32 %v518
        %vm582 = vweird.f32 %v576
        %vm583 = vmor %vm581, %vm582
        %v584 = vsel %vm583, %v576, %v580
        %v585 = vand.u32 2147483647, %v518
        %vm586 = vcmp.eq.f32.partialorder %v585, 8.507059e+37
        %v587 = vand.u32 %v518, 2147483648
        %v588 = vor.u32 1.1754944e-38, %v587
        %v589 = vsel %vm586, %v588, %v584
        %v590 = vmul.f32 %v498, %v589
        %v591 = vrcp.pop %v520
        %v592 = vmul.f32 %v520, %v591
        %v593 = vsub.f32 1.0, %v592
        %v594 = vmul.f32 %v591, %v593
        %v595 = vadd.f32 %v591, %v594
        %vm596 = vweird.f32 %v520
        %vm597 = vweird.f32 %v591
        %vm598 = vmor %vm596, %vm597
        %v599 = vsel %vm598, %v591, %v595
        %v600 = vand.u32 2147483647, %v520
        %vm601 = vcmp.eq.f32.partialorder %v600, 8.507059e+37
        %v602 = vand.u32 %v520, 2147483648
        %v603 = vor.u32 1.1754944e-38, %v602
        %v604 = vsel %vm601, %v603, %v599
        %v605 = vmul.f32 %v500, %v604
        %v606 = vrcp.pop %v522
        %v607 = vmul.f32 %v522, %v606
        %v608 = vsub.f32 1.0, %v607
        %v609 = vmul.f32 %v606, %v608
        %v610 = vadd.f32 %v606, %v609
        %vm611 = vweird.f32 %v522
        %vm612 = vweird.f32 %v606
        %vm613 = vmor %vm611, %vm612
        %v614 = vsel %vm613, %v606, %v610
        %v615 = vand.u32 2147483647, %v522
        %vm616 = vcmp.eq.f32.partialorder %v615, 8.507059e+37
        %v617 = vand.u32 %v522, 2147483648
        %v618 = vor.u32 1.1754944e-38, %v617
        %v619 = vsel %vm616, %v618, %v614
        %v620 = vmul.f32 %v502, %v619
        %v621 = vrcp.pop %v524
        %v622 = vmul.f32 %v524, %v621
        %v623 = vsub.f32 1.0, %v622
        %v624 = vmul.f32 %v621, %v623
        %v625 = vadd.f32 %v621, %v624
        %vm626 = vweird.f32 %v524
        %vm627 = vweird.f32 %v621
        %vm628 = vmor %vm626, %vm627
        %v629 = vsel %vm628, %v621, %v625
        %v630 = vand.u32 2147483647, %v524
        %vm631 = vcmp.eq.f32.partialorder %v630, 8.507059e+37
        %v632 = vand.u32 %v524, 2147483648
        %v633 = vor.u32 1.1754944e-38, %v632
        %v634 = vsel %vm631, %v633, %v629
        %v635 = vmul.f32 %v504, %v634
        %v636 = vrcp.pop %v526
        %v637 = vmul.f32 %v526, %v636
        %v638 = vsub.f32 1.0, %v637
        %v639 = vmul.f32 %v636, %v638
        %v640 = vadd.f32 %v636, %v639
        %vm641 = vweird.f32 %v526
        %vm642 = vweird.f32 %v636
        %vm643 = vmor %vm641, %vm642
        %v644 = vsel %vm643, %v636, %v640
        %v645 = vand.u32 2147483647, %v526
        %vm646 = vcmp.eq.f32.partialorder %v645, 8.507059e+37
        %v647 = vand.u32 %v526, 2147483648
        %v648 = vor.u32 1.1754944e-38, %v647
        %v649 = vsel %vm646, %v648, %v644
        %v650 = vmul.f32 %v506, %v649
        %v651 = vrcp.pop %v528
        %v652 = vmul.f32 %v528, %v651
        %v653 = vsub.f32 1.0, %v652
        %v654 = vmul.f32 %v651, %v653
        %v655 = vadd.f32 %v651, %v654
        %vm656 = vweird.f32 %v528
        %vm657 = vweird.f32 %v651
        %vm658 = vmor %vm656, %vm657
        %v659 = vsel %vm658, %v651, %v655
        %v660 = vand.u32 2147483647, %v528
        %vm661 = vcmp.eq.f32.partialorder %v660, 8.507059e+37
        %v662 = vand.u32 %v528, 2147483648
        %v663 = vor.u32 1.1754944e-38, %v662
        %v664 = vsel %vm661, %v663, %v659
        %v665 = vmul.f32 %v508, %v664
        %v666 = vrcp.pop %v530
        %v667 = vmul.f32 %v530, %v666
        %v668 = vsub.f32 1.0, %v667
        %v669 = vmul.f32 %v666, %v668
        %v670 = vadd.f32 %v666, %v669
        %vm671 = vweird.f32 %v530
        %vm672 = vweird.f32 %v666
        %vm673 = vmor %vm671, %vm672
        %v674 = vsel %vm673, %v666, %v670
        %v675 = vand.u32 2147483647, %v530
        %vm676 = vcmp.eq.f32.partialorder %v675, 8.507059e+37
        %v677 = vand.u32 %v530, 2147483648
        %v678 = vor.u32 1.1754944e-38, %v677
        %v679 = vsel %vm676, %v678, %v674
        %v680 = vmul.f32 %v510, %v679
        %v681 = vpack.c.bf16 %v545, %v545
        %v682 = vpack.c.bf16 %v560, %v560
        %v683 = vpack.c.bf16 %v575, %v575
        %v684 = vpack.c.bf16 %v590, %v590
        %v685 = vpack.c.bf16 %v605, %v605
        %v686 = vpack.c.bf16 %v620, %v620
        %v687 = vpack.c.bf16 %v635, %v635
        %v688 = vpack.c.bf16 %v650, %v650
        %v689 = vpack.c.bf16 %v665, %v665
        %v690 = vpack.c.bf16 %v680, %v680
        %691 = vst [vmem:[%s230] sm:$0xf] %v681
        %692 = vst [vmem:[%s230 + $0x4] sm:$0xf] %v682
        %693 = vst [vmem:[%s230 + $0x8] sm:$0xf] %v683
        %694 = vst [vmem:[%s230 + $0xc] sm:$0xf] %v684
        %695 = vst [vmem:[%s230 + $0x10] sm:$0xf] %v685
        %696 = vst [vmem:[%s230 + $0x14] sm:$0xf] %v686
        %697 = vst [vmem:[%s230 + $0x18] sm:$0xf] %v687
        %698 = vst [vmem:[%s230 + $0x1c] sm:$0xf] %v688
        %699 = vst [vmem:[%s230 + $0x20] sm:$0xf] %v689
        %700 = vst [vmem:[%s230 + $0x24] sm:$0xf] %v690
        %s701 = sand.u32 %s137, 1
        %s702 = scalar_lea.sflag [#allocation3], %s701
        %s703 = sand.u32 %s137, 1
        %s704 = smul.addr %s703, 40
        %s705 = scalar_lea.vmem [#allocation2], %s704
        // Predicated region
        $region41: #{tpu_custom_call.1} parent=39 // pred_check
          %p706 = pneg %p147
        $region42: #{tpu_custom_call.1} parent=39 // pred_check_branch
          %708 = sbr.rel (%p706) target = $region44
        $region43: #{tpu_custom_call.1} parent=39 // pred_region
          %s709 = smul.u32 10, %s19
          %s710 = ssub.s32 38, %s709
          %p711 = scmp.lt.s32.totalorder %s710, 10
          %s712 = scalar_select %p711, %s710, 10
          %s713 = smul.u32 4, %s712
          %s714 = ssub.s32 40, %s713
          %s715 = sshll.u32 %s714, 4
          %716 = vsyncadd %s702, %s715
          %p717 = scmp.ne.s32.totalorder 0, %s713
          %s718 = smul.addr %s709, 4
          %s719 = scalar_lea.hbm %s5, %s718
          %s720 = smul.u32 4, %s712
          %s721 = sshll.u32 %s705, 4
          %s722 = int_to_ptr.vmem [resolvable:$true] %s721
          %s723 = sshll.u32 %s719, 4
          %s724 = int_to_ptr.hbm [resolvable:$true] %s723
          %s725 = sshll.u32 %s720, 4
          %729 = dma.vmem_to_hbm [thread:$0]  (%p717), %s722, %s725, %s724, %s702, 64, 64, 4
        $region44: #{tpu_custom_call.1} parent=39 // pred_fallthru
          _
      $region40: #{tpu_custom_call.1} parent=5 // pred_fallthru
        _
      %p730 = scmp.le.s32.totalorder 2, %s14
      // Predicated region
      $region45: #{tpu_custom_call.1} parent=5 // pred_check
        %p731 = pneg %p730
      $region46: #{tpu_custom_call.1} parent=5 // pred_check_branch
        %733 = sbr.rel (%p731) target = $region48
      $region47: #{tpu_custom_call.1} parent=5 // pred_region
        %s734 = ssub.s32 %s14, 2
        // Predicated region
        $region49: #{tpu_custom_call.1} parent=47 // pred_check
          %p735 = pneg %p153
        $region50: #{tpu_custom_call.1} parent=47 // pred_check_branch
          %737 = sbr.rel (%p735) target = $region52
        $region51: #{tpu_custom_call.1} parent=47 // pred_region
          %s738 = sand.u32 %s138, 1
          %s739 = scalar_lea.sflag [#allocation3], %s738
          %s740 = sand.u32 %s138, 1
          %s741 = smul.addr %s740, 40
          %s742 = scalar_lea.vmem [#allocation2], %s741
          %744 = dma.done %s739, 640
        $region52: #{tpu_custom_call.1} parent=47 // pred_fallthru
          _
      $region48: #{tpu_custom_call.1} parent=5 // pred_fallthru
        _
    $region6: #{tpu_custom_call.1} parent=1 // loop_footer
      %s18 = sadd.s32 1, %s14
    $region7: #{tpu_custom_call.1} parent=1 // loop_footer_branch
      %13 = sbr.rel target = $region3
    $region8: #{tpu_custom_call.1} parent=1 // loop_exit
      _
    %745 = vsyncpa [#allocation3], 1
    %s746 = scalar_lea.sflag [#allocation3], 1
    %747 = vsyncpa %s746, 1

</llo_original>
